<compile_context>
chip_gen: v7x
topology: tpu7x:2x2x1
jax: 0.10.0
libtpu: 0.0.40
codegen_flags: <defaults>
</compile_context>

<pallas_src>
import jax
import jax.numpy as jnp
from jax.experimental import pallas as pl
from jax.experimental.pallas import tpu as pltpu

EPS = 1e-5


def conv_stats_kernel(x_ref, w_ref, sum_ref, sumsq_ref, sum_acc, sumsq_acc):
    """Per (n, hw-tile): y = w @ x (1x1 conv), accumulate per-channel sum / sumsq in VMEM
    scratch; emit this batch-element's partials only at the last HW tile."""
    j = pl.program_id(1)

    y = jnp.dot(w_ref[...], x_ref[...], preferred_element_type=jnp.float32)  # (Cout, t_hw)

    @pl.when(j == 0)
    def _():
        sum_acc[...] = jnp.zeros_like(sum_acc)
        sumsq_acc[...] = jnp.zeros_like(sumsq_acc)

    sum_acc[...] += jnp.sum(y, axis=1, keepdims=True)        # (Cout, 1)
    sumsq_acc[...] += jnp.sum(y * y, axis=1, keepdims=True)  # (Cout, 1)

    @pl.when(j == pl.num_programs(1) - 1)
    def _():
        sum_ref[...] = sum_acc[...]
        sumsq_ref[...] = sumsq_acc[...]


def conv_bn_apply_kernel(x_ref, w_ref, scale_ref, shift_ref, o_ref):
    """Per (n, hw-tile): recompute y = w @ x and apply the fused BN affine."""
    y = jnp.dot(w_ref[...], x_ref[...], preferred_element_type=jnp.float32)  # (Cout, t_hw)
    o_ref[...] = (y * scale_ref[...] + shift_ref[...]).astype(o_ref.dtype)


def _pick_hw_tile(hw, cin, cout, itemsize=4, vmem_budget=12 * 1024 * 1024):
    """Pad HW to a multiple of 128 and pick the largest 128-multiple tile that divides the
    padded HW and fits the (double-buffered) VMEM budget."""
    hwp = ((hw + 127) // 128) * 128
    q = hwp // 128
    bytes_per_col = 2 * itemsize * (cin + cout)  # x block + out block, double-buffered
    max_units = max(1, min(q, vmem_budget // (128 * bytes_per_col)))
    d = 1
    for cand in range(max_units, 0, -1):
        if q % cand == 0:
            d = cand
            break
    return hwp, 128 * d


def shortcut_forward(x_nchw, conv_w, gamma, beta, *, input_dtype=jnp.float32):
    """x_nchw: (N, Cin, H, W); conv_w: (Cout, Cin, 1, 1); gamma/beta: (Cout,)."""
    N, Cin, H, W = x_nchw.shape
    Cout = conv_w.shape[0]
    HW = H * W
    M = N * HW  # true element count per channel for BN stats

    HWp, t_hw = _pick_hw_tile(HW, Cin, Cout)
    n_hw_tiles = HWp // t_hw

    # Glue: contiguous reshape only (no transpose). Zero-pad spatial to the tile grid;
    # zero columns produce zero conv outputs and thus do not perturb sum / sumsq.
    x3d = x_nchw.reshape(N, Cin, HW).astype(input_dtype)
    if HWp != HW:
        x3d = jnp.pad(x3d, ((0, 0), (0, 0), (0, HWp - HW)))
    w2d = conv_w.reshape(Cout, Cin).astype(input_dtype)

    # ---- Pass 1: per-batch-element channel sum / sum-of-squares (no activation writeback).
    csum_n, csumsq_n = pl.pallas_call(
        conv_stats_kernel,
        out_shape=(
            jax.ShapeDtypeStruct((N, Cout, 1), jnp.float32),
            jax.ShapeDtypeStruct((N, Cout, 1), jnp.float32),
        ),
        grid_spec=pltpu.PrefetchScalarGridSpec(
            num_scalar_prefetch=0,
            grid=(N, n_hw_tiles),
            in_specs=[
                pl.BlockSpec((None, Cin, t_hw), lambda n, j: (n, 0, j)),
                pl.BlockSpec((Cout, Cin), lambda n, j: (0, 0)),
            ],
            out_specs=[
                pl.BlockSpec((None, Cout, 1), lambda n, j: (n, 0, 0)),
                pl.BlockSpec((None, Cout, 1), lambda n, j: (n, 0, 0)),
            ],
            scratch_shapes=[
                pltpu.VMEM((Cout, 1), jnp.float32),
                pltpu.VMEM((Cout, 1), jnp.float32),
            ],
        ),
        compiler_params=pltpu.CompilerParams(
            dimension_semantics=("parallel", "arbitrary"),
        ),
    )(x3d, w2d)

    # Tiny scalar glue: fold batch stats + affine into per-channel scale/shift (Cout, 1).
    csum = jnp.sum(csum_n, axis=0)      # (Cout, 1)
    csumsq = jnp.sum(csumsq_n, axis=0)  # (Cout, 1)
    mean = csum / M
    var = jnp.maximum(csumsq / M - mean * mean, 0.0)  # biased variance (training-mode BN)
    scale = gamma.reshape(Cout, 1) * jax.lax.rsqrt(var + EPS)
    shift = beta.reshape(Cout, 1) - mean * scale

    # ---- Pass 2: recompute conv + fused BN affine, output directly in (N, Cout, HW).
    out3d = pl.pallas_call(
        conv_bn_apply_kernel,
        out_shape=jax.ShapeDtypeStruct((N, Cout, HWp), jnp.float32),
        grid_spec=pltpu.PrefetchScalarGridSpec(
            num_scalar_prefetch=0,
            grid=(N, n_hw_tiles),
            in_specs=[
                pl.BlockSpec((None, Cin, t_hw), lambda n, j: (n, 0, j)),
                pl.BlockSpec((Cout, Cin), lambda n, j: (0, 0)),
                pl.BlockSpec((Cout, 1), lambda n, j: (0, 0)),
                pl.BlockSpec((Cout, 1), lambda n, j: (0, 0)),
            ],
            out_specs=pl.BlockSpec((None, Cout, t_hw), lambda n, j: (n, 0, j)),
        ),
        compiler_params=pltpu.CompilerParams(
            dimension_semantics=("parallel", "parallel"),
        ),
    )(x3d, w2d, scale, shift)

    # Glue: drop spatial padding; already NCHW.
    if HWp != HW:
        out3d = out3d[:, :, :HW]
    return out3d.reshape(N, Cout, H, W)


def reference_forward(x_nchw, conv_w, gamma, beta):
    """Pure-JAX reference matching PyTorch: conv1x1 (no bias) + training-mode BatchNorm2d."""
    y = jnp.einsum(
        "nchw,oc->nohw", x_nchw, conv_w.reshape(conv_w.shape[0], conv_w.shape[1])
    )
    mean = y.mean(axis=(0, 2, 3), keepdims=True)
    var = ((y - mean) ** 2).mean(axis=(0, 2, 3), keepdims=True)
    g = gamma.reshape(1, -1, 1, 1)
    b = beta.reshape(1, -1, 1, 1)
    return g * (y - mean) / jnp.sqrt(var + EPS) + b


if __name__ == "__main__":
    key = jax.random.PRNGKey(0)
    kx, kw, kg, kb = jax.random.split(key, 4)

    N, Cin, H, W = 2, 4, 16, 16
    Cout = 8

    x = jax.random.normal(kx, (N, Cin, H, W), dtype=jnp.float32)
    # Deterministic parameter init (PyTorch shapes: conv (Cout, Cin, 1, 1), BN affine (Cout,)).
    conv_w = jax.random.normal(kw, (Cout, Cin, 1, 1), dtype=jnp.float32) * 0.5
    gamma = 1.0 + 0.1 * jax.random.normal(kg, (Cout,), dtype=jnp.float32)
    beta = 0.1 * jax.random.normal(kb, (Cout,), dtype=jnp.float32)

    out = jax.block_until_ready(shortcut_forward(x, conv_w, gamma, beta))
    ref = jax.block_until_ready(reference_forward(x, conv_w, gamma, beta))

    assert out.shape == (N, Cout, H, W), out.shape
    assert jnp.allclose(out, ref, atol=1e-4, rtol=1e-4), float(jnp.max(jnp.abs(out - ref)))
    print("KERNEL_OK")
</pallas_src>

<mosaic_0001>
module attributes {stable_mosaic.version = 11 : i64} {
  func.func @conv_stats_kernel(%arg0: i32, %arg1: i32, %arg2: memref<1x4x256xf32, #tpu.memory_space<vmem>>, %arg3: memref<8x4xf32, #tpu.memory_space<vmem>>, %arg4: memref<1x8x1xf32, #tpu.memory_space<vmem>>, %arg5: memref<1x8x1xf32, #tpu.memory_space<vmem>>, %arg6: memref<8x1xf32, #tpu.memory_space<vmem>>, %arg7: memref<8x1xf32, #tpu.memory_space<vmem>>) attributes {dimension_semantics = [#tpu.dimension_semantics<parallel>, #tpu.dimension_semantics<arbitrary>], iteration_bounds = array<i64: 2, 1>, scalar_prefetch = 0 : i64, scratch_operands = 2 : i64, tpu.core_type = #tpu.core_type<tc>, window_params = [{transform_indices = @transform_0, window_bounds = array<i64: 1, 4, 256>}, {pipeline_mode = #tpu.pipeline_mode<synchronous>, transform_indices = @transform_1, window_bounds = array<i64: 8, 4>}, {transform_indices = @transform_2, window_bounds = array<i64: 1, 8, 1>}, {transform_indices = @transform_3, window_bounds = array<i64: 1, 8, 1>}]} {
    %c0 = arith.constant 0 : index
    %c0_0 = arith.constant 0 : index
    %0 = vector.load %arg3[%c0, %c0_0] : memref<8x4xf32, #tpu.memory_space<vmem>>, vector<8x4xf32>
    %c0_1 = arith.constant 0 : index
    %c0_2 = arith.constant 0 : index
    %c0_3 = arith.constant 0 : index
    %1 = vector.load %arg2[%c0_1, %c0_2, %c0_3] : memref<1x4x256xf32, #tpu.memory_space<vmem>>, vector<1x4x256xf32>
    %2 = vector.shape_cast %1 : vector<1x4x256xf32> to vector<4x256xf32>
    %cst = arith.constant dense<0.000000e+00> : vector<8x256xf32>
    %3 = tpu.matmul %0, %2, %cst {dimension_numbers = #tpu.dot_dimension_numbers<[1], [0], [0], [1], [0, 0, 1, 1], [], []>} : vector<8x4xf32>, vector<4x256xf32>, vector<8x256xf32> -> vector<8x256xf32>
    %c0_i32 = arith.constant 0 : i32
    %4 = arith.cmpi eq, %arg1, %c0_i32 : i32
    %5 = arith.extui %4 : i1 to i32
    %c0_i32_4 = arith.constant 0 : i32
    %6 = arith.cmpi ne, %5, %c0_i32_4 : i32
    scf.if %6 {
      %cst_17 = arith.constant 0.000000e+00 : f32
      %21 = vector.broadcast %cst_17 : f32 to vector<8x1xf32>
      %c0_18 = arith.constant 0 : index
      %c0_19 = arith.constant 0 : index
      %22 = vector.load %arg6[%c0_18, %c0_19] : memref<8x1xf32, #tpu.memory_space<vmem>>, vector<8x1xf32>
      tpu.vector_store %arg6[%c0_18, %c0_19], %21 {strides = array<i32>} : memref<8x1xf32, #tpu.memory_space<vmem>>, vector<8x1xf32>,
      %cst_20 = arith.constant 0.000000e+00 : f32
      %23 = vector.broadcast %cst_20 : f32 to vector<8x1xf32>
      %c0_21 = arith.constant 0 : index
      %c0_22 = arith.constant 0 : index
      %24 = vector.load %arg7[%c0_21, %c0_22] : memref<8x1xf32, #tpu.memory_space<vmem>>, vector<8x1xf32>
      tpu.vector_store %arg7[%c0_21, %c0_22], %23 {strides = array<i32>} : memref<8x1xf32, #tpu.memory_space<vmem>>, vector<8x1xf32>,
    } else {
    }
    %c0_5 = arith.constant 0 : index
    %c0_6 = arith.constant 0 : index
    %7 = vector.load %arg6[%c0_5, %c0_6] : memref<8x1xf32, #tpu.memory_space<vmem>>, vector<8x1xf32>
    %cst_7 = arith.constant dense<0.000000e+00> : vector<8xf32>
    %8 = vector.multi_reduction <add>, %3, %cst_7 [1] : vector<8x256xf32> to vector<8xf32>
    %9 = vector.shape_cast %8 : vector<8xf32> to vector<8x1xf32>
    %10 = arith.addf %7, %9 : vector<8x1xf32>
    %c0_8 = arith.constant 0 : index
    %c0_9 = arith.constant 0 : index
    %11 = vector.load %arg6[%c0_8, %c0_9] : memref<8x1xf32, #tpu.memory_space<vmem>>, vector<8x1xf32>
    tpu.vector_store %arg6[%c0_8, %c0_9], %10 {strides = array<i32>} : memref<8x1xf32, #tpu.memory_space<vmem>>, vector<8x1xf32>,
    %c0_10 = arith.constant 0 : index
    %c0_11 = arith.constant 0 : index
    %12 = vector.load %arg7[%c0_10, %c0_11] : memref<8x1xf32, #tpu.memory_space<vmem>>, vector<8x1xf32>
    %13 = arith.mulf %3, %3 : vector<8x256xf32>
    %cst_12 = arith.constant dense<0.000000e+00> : vector<8xf32>
    %14 = vector.multi_reduction <add>, %13, %cst_12 [1] : vector<8x256xf32> to vector<8xf32>
    %15 = vector.shape_cast %14 : vector<8xf32> to vector<8x1xf32>
    %16 = arith.addf %12, %15 : vector<8x1xf32>
    %c0_13 = arith.constant 0 : index
    %c0_14 = arith.constant 0 : index
    %17 = vector.load %arg7[%c0_13, %c0_14] : memref<8x1xf32, #tpu.memory_space<vmem>>, vector<8x1xf32>
    tpu.vector_store %arg7[%c0_13, %c0_14], %16 {strides = array<i32>} : memref<8x1xf32, #tpu.memory_space<vmem>>, vector<8x1xf32>,
    %c0_i32_15 = arith.constant 0 : i32
    %18 = arith.cmpi eq, %arg1, %c0_i32_15 : i32
    %19 = arith.extui %18 : i1 to i32
    %c0_i32_16 = arith.constant 0 : i32
    %20 = arith.cmpi ne, %19, %c0_i32_16 : i32
    scf.if %20 {
      %c0_17 = arith.constant 0 : index
      %c0_18 = arith.constant 0 : index
      %21 = vector.load %arg6[%c0_17, %c0_18] : memref<8x1xf32, #tpu.memory_space<vmem>>, vector<8x1xf32>
      %c0_19 = arith.constant 0 : index
      %c0_20 = arith.constant 0 : index
      %c0_21 = arith.constant 0 : index
      %22 = vector.load %arg4[%c0_19, %c0_20, %c0_21] : memref<1x8x1xf32, #tpu.memory_space<vmem>>, vector<1x8x1xf32>
      %23 = vector.shape_cast %22 : vector<1x8x1xf32> to vector<8x1xf32>
      %24 = vector.shape_cast %21 : vector<8x1xf32> to vector<1x8x1xf32>
      tpu.vector_store %arg4[%c0_19, %c0_20, %c0_21], %24 {strides = array<i32>} : memref<1x8x1xf32, #tpu.memory_space<vmem>>, vector<1x8x1xf32>,
      %c0_22 = arith.constant 0 : index
      %c0_23 = arith.constant 0 : index
      %25 = vector.load %arg7[%c0_22, %c0_23] : memref<8x1xf32, #tpu.memory_space<vmem>>, vector<8x1xf32>
      %c0_24 = arith.constant 0 : index
      %c0_25 = arith.constant 0 : index
      %c0_26 = arith.constant 0 : index
      %26 = vector.load %arg5[%c0_24, %c0_25, %c0_26] : memref<1x8x1xf32, #tpu.memory_space<vmem>>, vector<1x8x1xf32>
      %27 = vector.shape_cast %26 : vector<1x8x1xf32> to vector<8x1xf32>
      %28 = vector.shape_cast %25 : vector<8x1xf32> to vector<1x8x1xf32>
      tpu.vector_store %arg5[%c0_24, %c0_25, %c0_26], %28 {strides = array<i32>} : memref<1x8x1xf32, #tpu.memory_space<vmem>>, vector<1x8x1xf32>,
    } else {
    }
    return
  }
  func.func @transform_0(%arg0: i32, %arg1: i32) -> (i32, i32, i32) {
    %c0_i32 = arith.constant 0 : i32
    %c0_i32_0 = arith.constant 0 : i32
    return %arg0, %c0_i32, %arg1 : i32, i32, i32
  }
  func.func @transform_1(%arg0: i32, %arg1: i32) -> (i32, i32) {
    %c0_i32 = arith.constant 0 : i32
    %c0_i32_0 = arith.constant 0 : i32
    %c0_i32_1 = arith.constant 0 : i32
    return %c0_i32, %c0_i32_0 : i32, i32
  }
  func.func @transform_2(%arg0: i32, %arg1: i32) -> (i32, i32, i32) {
    %c0_i32 = arith.constant 0 : i32
    %c0_i32_0 = arith.constant 0 : i32
    %c0_i32_1 = arith.constant 0 : i32
    return %arg0, %c0_i32, %c0_i32_0 : i32, i32, i32
  }
  func.func @transform_3(%arg0: i32, %arg1: i32) -> (i32, i32, i32) {
    %c0_i32 = arith.constant 0 : i32
    %c0_i32_0 = arith.constant 0 : i32
    %c0_i32_1 = arith.constant 0 : i32
    return %arg0, %c0_i32, %c0_i32_0 : i32, i32, i32
  }
}

</mosaic_0001>

<llo_original>
// kernel: tpu_custom_call.1
$region0: #{tpu_custom_call.1}
  #allocation0 [shape = 'u32[]', space=smem, size = 0x4, offset = 0x4, fixed_abs, tag = 'smem constant byte address 0x4 - core index']
  #allocation1 [shape = 'u32[144,128]{1,0:T(1,128)}', space=vmem, size = 0x12000, scoped, tag = 'internal scratch']
  #allocation2 [shape = 'f32[8,1]{1,0:T(8,128)}', space=vmem, size = 0x1000, scoped, tag = 'scratch operand']
  #allocation3 [shape = 'f32[8,1]{1,0:T(8,128)}', space=vmem, size = 0x1000, scoped, tag = 'scratch operand']
  %s0 = inlined_call_operand.hbm [shape: f32[2,4,256], index: 0, kind: input, shape index: {}]
  %s1 = inlined_call_operand.vmem [shape: f32[8,4], index: 1, kind: input, shape index: {}]
  %s2 = inlined_call_operand.vmem [shape: f32[2,8,1], index: 2, kind: output, shape index: {0}]
  %s3 = inlined_call_operand.vmem [shape: f32[2,8,1], index: 3, kind: output, shape index: {1}]
  %4 = xla_tuple %s2, %s3
  %s5 = sld [smem:[#allocation0]]
  $region61: #{tpu_custom_call.1} parent=0
    _
  %s7 = ssub.s32 1, %s5
  %s8 = scalar_select 0, %s7, %s5
  $region1: #{tpu_custom_call.1} parent=0
    #allocation4 [shape = 'u8[8192]{0}', space=vmem, size = 0x2000, scoped, tag = 'input window, operand 0']
    #allocation5 [shape = 's32[2]{0}', space=sflag, size = 0x8, scoped, tag = 'scoped memory for tpu_custom_call.1']
    %9 = vsyncpa [#allocation5], 0
    %s10 = scalar_lea.sflag [#allocation5], 1
    %11 = vsyncpa %s10, 0
    loop: start=0, step=1, limit=4
    $region2: #{tpu_custom_call.1} parent=1 // loop_pre_header
      _
    $region3: #{tpu_custom_call.1} parent=1 // loop_header
      %s13 = sphi 0, %s17
      %p14 = scmp.ge.s32.totalorder %s13, 4
      %s20 = sphi 0, %s32
      %s21 = sphi 0, %s28
      %s22 = sphi 0, %s20
      %s23 = sphi 0, %s21
      %s24 = sphi 0, %s22
      %s25 = sphi 0, %s23
      %s37 = sphi 0, %s39
      %s40 = sphi 0, %s37
      %s41 = sphi 0, %s40
      %s57 = sphi 0, %s41
      %s61 = sphi 0, %s61
      %s63 = sphi 0, %s61
      %s64 = sphi 0, %s63
      %s78 = sphi 0, %s64
      %s84 = sphi 0, %s86
      %s87 = sphi 0, %s84
      %s88 = sphi 0, %s87
      %s104 = sphi 0, %s88
      %s110 = sphi 0, %s112
      %s113 = sphi 0, %s110
      %s114 = sphi 0, %s113
      %s130 = sphi 0, %s114
    $region4: #{tpu_custom_call.1} parent=1 // loop_header_branch
      %16 = sbr.rel (%p14) target = $region8
    $region5: #{tpu_custom_call.1} parent=1 // loop_body
      %s18 = ssub.s32 %s13, 1
      %s19 = ssub.s32 %s13, 2
      %s26 = sadd.s32 1, %s21
      %p27 = scmp.ge.s32.totalorder %s26, 1
      %s28 = scalar_select %p27, 0, %s26
      %s29 = sadd.s32 1, %s20
      %s30 = scalar_select %p27, %s29, %s20
      %p31 = scmp.ge.s32.totalorder %s30, 2
      %s32 = scalar_select %p31, 0, %s30
      %s33 = ssub.s32 %s20, %s32
      %s34 = ssub.s32 %s21, %s28
      %s35 = sor.u32 %s33, %s34
      %p36 = scmp.eq.s32.totalorder %s35, 0
      %s38 = sadd.s32 %s37, 1
      %s39 = scalar_select %p36, %s37, %s38
      %p42 = pneg %p36
      %p43 = scmp.eq.s32.totalorder %s13, 1
      %p44 = por %p42, %p43
      %p45 = scmp.ne.s32.totalorder %s37, %s40
      %p46 = scmp.eq.s32.totalorder %s13, 0
      %p47 = por %p45, %p46
      %p48 = scmp.ne.s32.totalorder %s37, %s40
      %p49 = scmp.eq.s32.totalorder %s18, 1
      %p50 = por %p48, %p49
      %p51 = scmp.ne.s32.totalorder %s40, %s41
      %p52 = scmp.eq.s32.totalorder %s18, 0
      %p53 = por %p51, %p52
      %p54 = scmp.ne.s32.totalorder %s40, %s41
      %p55 = scmp.eq.s32.totalorder %s19, 1
      %p56 = por %p54, %p55
      %p58 = scmp.ne.s32.totalorder %s41, %s57
      %p59 = scmp.eq.s32.totalorder %s19, 0
      %p60 = por %p58, %p59
      %s62 = sadd.s32 %s61, 1
      %p65 = scmp.eq.s32.totalorder %s13, 1
      %p66 = scmp.ne.s32.totalorder %s61, %s63
      %p67 = scmp.eq.s32.totalorder %s13, 0
      %p68 = por %p66, %p67
      %p69 = scmp.ne.s32.totalorder %s61, %s63
      %p70 = scmp.eq.s32.totalorder %s18, 1
      %p71 = por %p69, %p70
      %p72 = scmp.ne.s32.totalorder %s63, %s64
      %p73 = scmp.eq.s32.totalorder %s18, 0
      %p74 = por %p72, %p73
      %p75 = scmp.ne.s32.totalorder %s63, %s64
      %p76 = scmp.eq.s32.totalorder %s19, 1
      %p77 = por %p75, %p76
      %p79 = scmp.ne.s32.totalorder %s64, %s78
      %p80 = scmp.eq.s32.totalorder %s19, 0
      %p81 = por %p79, %p80
      %s82 = ssub.s32 %s20, %s32
      %p83 = scmp.eq.s32.totalorder %s82, 0
      %s85 = sadd.s32 %s84, 1
      %s86 = scalar_select %p83, %s84, %s85
      %p89 = pneg %p83
      %p90 = scmp.eq.s32.totalorder %s13, 1
      %p91 = por %p89, %p90
      %p92 = scmp.ne.s32.totalorder %s84, %s87
      %p93 = scmp.eq.s32.totalorder %s13, 0
      %p94 = por %p92, %p93
      %p95 = scmp.ne.s32.totalorder %s84, %s87
      %p96 = scmp.eq.s32.totalorder %s18, 1
      %p97 = por %p95, %p96
      %p98 = scmp.ne.s32.totalorder %s87, %s88
      %p99 = scmp.eq.s32.totalorder %s18, 0
      %p100 = por %p98, %p99
      %p101 = scmp.ne.s32.totalorder %s87, %s88
      %p102 = scmp.eq.s32.totalorder %s19, 1
      %p103 = por %p101, %p102
      %p105 = scmp.ne.s32.totalorder %s88, %s104
      %p106 = scmp.eq.s32.totalorder %s19, 0
      %p107 = por %p105, %p106
      %s108 = ssub.s32 %s20, %s32
      %p109 = scmp.eq.s32.totalorder %s108, 0
      %s111 = sadd.s32 %s110, 1
      %s112 = scalar_select %p109, %s110, %s111
      %p115 = pneg %p109
      %p116 = scmp.eq.s32.totalorder %s13, 1
      %p117 = por %p115, %p116
      %p118 = scmp.ne.s32.totalorder %s110, %s113
      %p119 = scmp.eq.s32.totalorder %s13, 0
      %p120 = por %p118, %p119
      %p121 = scmp.ne.s32.totalorder %s110, %s113
      %p122 = scmp.eq.s32.totalorder %s18, 1
      %p123 = por %p121, %p122
      %p124 = scmp.ne.s32.totalorder %s113, %s114
      %p125 = scmp.eq.s32.totalorder %s18, 0
      %p126 = por %p124, %p125
      %p127 = scmp.ne.s32.totalorder %s113, %s114
      %p128 = scmp.eq.s32.totalorder %s19, 1
      %p129 = por %p127, %p128
      %p131 = scmp.ne.s32.totalorder %s114, %s130
      %p132 = scmp.eq.s32.totalorder %s19, 0
      %p133 = por %p131, %p132
      %p134 = scmp.le.s32.totalorder 1, %s13
      %p135 = scmp.lt.s32.totalorder %s13, 3
      %p136 = pnand %p134, %p135
      %p137 = pneg %p136
      // Predicated region
      $region9: #{tpu_custom_call.1} parent=5 // pred_check
        _
      $region10: #{tpu_custom_call.1} parent=5 // pred_check_branch
        %139 = sbr.rel (%p136) target = $region12
      $region11: #{tpu_custom_call.1} parent=5 // pred_region
        %s140 = ssub.s32 %s13, 1
        // Predicated region
        $region13: #{tpu_custom_call.1} parent=11 // pred_check
          %p141 = pneg %p74
        $region14: #{tpu_custom_call.1} parent=11 // pred_check_branch
          %143 = sbr.rel (%p141) target = $region16
        $region15: #{tpu_custom_call.1} parent=11 // pred_region
          _
        $region16: #{tpu_custom_call.1} parent=11 // pred_fallthru
          _
      $region12: #{tpu_custom_call.1} parent=5 // pred_fallthru
        _
      %p144 = scmp.lt.s32.totalorder %s13, 2
      // Predicated region
      $region17: #{tpu_custom_call.1} parent=5 // pred_check
        %p145 = pneg %p144
      $region18: #{tpu_custom_call.1} parent=5 // pred_check_branch
        %147 = sbr.rel (%p145) target = $region20
      $region19: #{tpu_custom_call.1} parent=5 // pred_region
        // Predicated region
        $region21: #{tpu_custom_call.1} parent=19 // pred_check
          %p148 = pneg %p47
        $region22: #{tpu_custom_call.1} parent=19 // pred_check_branch
          %150 = sbr.rel (%p148) target = $region24
        $region23: #{tpu_custom_call.1} parent=19 // pred_region
          %s151 = sand.u32 %s37, 1
          %s152 = scalar_lea.sflag [#allocation5], %s151
          %s153 = sand.u32 %s37, 1
          %s154 = smul.addr %s153, 8
          %s155 = scalar_lea.vmem [#allocation4], %s154
          %s156 = smul.u32 2, %s21
          %s158 = ssub.s32 128, 128
          %159 = vsyncadd %s152, %s158
          %s160 = smul.addr %s20, 2
          %s161 = sadd.s32 %s156, %s160
          %s162 = smul.addr %s161, 64
          %s163 = scalar_lea.hbm %s0, %s162
          %s165 = sshll.u32 %s155, 4
          %s166 = int_to_ptr.vmem [resolvable:$true] %s165
          %168 = dma.hbm_to_vmem [thread:$0]  %s163, 128, %s166, %s152
        $region24: #{tpu_custom_call.1} parent=19 // pred_fallthru
          _
      $region20: #{tpu_custom_call.1} parent=5 // pred_fallthru
        _
      %p169 = scmp.le.s32.totalorder 1, %s13
      %p170 = scmp.lt.s32.totalorder %s13, 3
      %p171 = pnand %p169, %p170
      %p172 = pneg %p171
      // Predicated region
      $region25: #{tpu_custom_call.1} parent=5 // pred_check
        _
      $region26: #{tpu_custom_call.1} parent=5 // pred_check_branch
        %174 = sbr.rel (%p171) target = $region28
      $region27: #{tpu_custom_call.1} parent=5 // pred_region
        %s175 = ssub.s32 %s13, 1
        %s176 = sand.u32 %s40, 1
        %s177 = scalar_lea.sflag [#allocation5], %s176
        %s178 = sand.u32 %s40, 1
        %s179 = smul.addr %s178, 8
        %s180 = scalar_lea.vmem [#allocation4], %s179
        // Predicated region
        $region29: #{tpu_custom_call.1} parent=27 // pred_check
          %p181 = pneg %p53
        $region30: #{tpu_custom_call.1} parent=27 // pred_check_branch
          %183 = sbr.rel (%p181) target = $region32
        $region31: #{tpu_custom_call.1} parent=27 // pred_region
          %184 = dma.done %s177, 128
        $region32: #{tpu_custom_call.1} parent=27 // pred_fallthru
          _
        %s185 = sand.u32 %s40, 1
        %s186 = scalar_lea.sflag [#allocation5], %s185
        %s187 = sand.u32 %s40, 1
        %s188 = smul.addr %s187, 8
        %s189 = scalar_lea.vmem [#allocation4], %s188
        %p190 = pneg %p53
        %p191 = pneg %p50
        %p192 = pneg %p74
        %p193 = pneg %p71
        %p194 = pneg %p100
        %p195 = pneg %p97
        %p196 = scmp.lt.s32.totalorder %s22, 1
        %s197 = scalar_select %p196, %s22, 1
        %s198 = smul.addr %s197, 8
        %s199 = scalar_lea.vmem %s2, %s198
        %p200 = pneg %p126
        %p201 = pneg %p123
        %p202 = scmp.lt.s32.totalorder %s22, 1
        %s203 = scalar_select %p202, %s22, 1
        %s204 = smul.addr %s203, 8
        %s205 = scalar_lea.vmem %s3, %s204
        %s206 = smul.u32 2, %s23
        %p207 = scmp.lt.s32.totalorder %s22, 1
        %s208 = scalar_select %p207, %s22, 1
        %s209 = smul.addr %s208, 8
        %s210 = scalar_lea.vmem %s2, %s209
        %p211 = scmp.lt.s32.totalorder %s22, 1
        %s212 = scalar_select %p211, %s22, 1
        %s213 = smul.addr %s212, 8
        %s214 = scalar_lea.vmem %s3, %s213
        %v215 = vld [vmem:[%s1] sm:$0xff]
        %v216 = vld [vmem:[%s180] sm:$0xff]
        %v218 = vcombine.high %v216, %v216
        %vm219 = vcmask 31744
        %v221 = vsel %vm219, %v215, 0
        %vm223 = vcmask 1043456
        %v224 = vsel %vm223, %v216, 0
        %v226 = vsel %vm223, %v218, 0
        %228 = vmatprep.subr.mxu0 %v226
        %229 = vmatpush1.msra.mxu0 %v224
        %230 = vmatprep.subr.mxu0 0.0
        %231 = vmatpush1.msra.mxu0 0.0
        %232 = vmatprep.subr.mxu0 0.0
        %233 = vmatpush1.msra.mxu0 0.0
        %234 = vmatprep.subr.mxu0 0.0
        %235 = vmatpush1.msra.mxu0 0.0
        %236 = vmatprep.subr.mxu0 0.0
        %237 = vmatpush1.msra.mxu0 0.0
        %238 = vmatprep.subr.mxu0 0.0
        %239 = vmatpush1.msra.mxu0 0.0
        %240 = vmatprep.subr.mxu0 0.0
        %241 = vmatpush1.msra.mxu0 0.0
        %242 = vmatprep.subr.mxu0 0.0
        %243 = vmatpush1.msra.mxu0 0.0
        %244 = vmatprep.subr.mxu0 0.0
        %245 = vmatpush1.msra.mxu0 0.0
        %246 = vmatprep.subr.mxu0 0.0
        %247 = vmatpush1.msra.mxu0 0.0
        %248 = vmatprep.subr.mxu0 0.0
        %249 = vmatpush1.msra.mxu0 0.0
        %250 = vmatprep.subr.mxu0 0.0
        %251 = vmatpush1.msra.mxu0 0.0
        %252 = vmatprep.subr.mxu0 0.0
        %253 = vmatpush1.msra.mxu0 0.0
        %254 = vmatprep.subr.mxu0 0.0
        %255 = vmatpush1.msra.mxu0 0.0
        %256 = vmatprep.subr.mxu0 0.0
        %257 = vmatpush1.msra.mxu0 0.0
        %258 = vmatprep.subr.mxu0 0.0
        %259 = vmatpush1.msra.mxu0 0.0
        %260 = vmatprep.subr.mxu0 0.0
        %261 = vmatpush1.msra.mxu0 0.0
        %262 = vmatprep.subr.mxu0 0.0
        %263 = vmatpush1.msra.mxu0 0.0
        %264 = vmatprep.subr.mxu0 0.0
        %265 = vmatpush1.msra.mxu0 0.0
        %266 = vmatprep.subr.mxu0 0.0
        %267 = vmatpush1.msra.mxu0 0.0
        %268 = vmatprep.subr.mxu0 0.0
        %269 = vmatpush1.msra.mxu0 0.0
        %270 = vmatprep.subr.mxu0 0.0
        %271 = vmatpush1.msra.mxu0 0.0
        %272 = vmatprep.subr.mxu0 0.0
        %273 = vmatpush1.msra.mxu0 0.0
        %274 = vmatprep.subr.mxu0 0.0
        %275 = vmatpush1.msra.mxu0 0.0
        %276 = vmatprep.subr.mxu0 0.0
        %277 = vmatpush1.msra.mxu0 0.0
        %278 = vmatprep.subr.mxu0 0.0
        %279 = vmatpush1.msra.mxu0 0.0
        %280 = vmatprep.subr.mxu0 0.0
        %281 = vmatpush1.msra.mxu0 0.0
        %282 = vmatprep.subr.mxu0 0.0
        %283 = vmatpush1.msra.mxu0 0.0
        %284 = vmatprep.subr.mxu0 0.0
        %285 = vmatpush1.msra.mxu0 0.0
        %286 = vmatprep.subr.mxu0 0.0
        %287 = vmatpush1.msra.mxu0 0.0
        %288 = vmatprep.subr.mxu0 0.0
        %289 = vmatpush1.msra.mxu0 0.0
        %290 = vmatprep.subr.mxu0 0.0
        %291 = vmatpush1.msra.mxu0 0.0
        %292 = vmatprep.mubr.f32.mxu0 0.0
        %293 = vmatmul.mubr.f32.gmra.mrb[0].mxu0 %v221
        %v294 = vpop.f32.mrb[0].mxu0
        %v295 = vadd.f32 0.0, %v294
        %v296 = vpop.f32.mrb[0].mxu0
        %v297 = vadd.f32 0.0, %v296
        %298 = vdwg.mxu0
        %p299 = scmp.eq.s32.totalorder %s23, 0
        // Predicated region
        $region33: #{tpu_custom_call.1} parent=27 // pred_check
          %p300 = pneg %p299
        $region34: #{tpu_custom_call.1} parent=27 // pred_check_branch
          %302 = sbr.rel (%p300) target = $region36
        $region35: #{tpu_custom_call.1} parent=27 // pred_region
          %vm303 = vcmask 7168
          %304 = vst.msk [vmem:[#allocation2] sm:$0xff] %vm303, 0.0
          %305 = vst.msk [vmem:[#allocation3] sm:$0xff] %vm303, 0.0
        $region36: #{tpu_custom_call.1} parent=27 // pred_fallthru
          _
        %v306 = vld [vmem:[#allocation2] sm:$0xff]
        %v307 = vadd.f32 %v295, %v297
        %308 = vadd.xlane.f32.xlu0 %v307
        %v309 = vpop.xlane.xlu0 %308
        %v310 = vadd.f32 %v306, %v309
        %vm311 = vcmask 7168
        %312 = vst.msk [vmem:[#allocation2] sm:$0xff] %vm311, %v310
        %v313 = vld [vmem:[#allocation3] sm:$0xff]
        %v314 = vmul.f32 %v295, %v295
        %v315 = vmul.f32 %v297, %v297
        %v316 = vadd.f32 %v314, %v315
        %317 = vadd.xlane.f32.xlu0 %v316
        %v318 = vpop.xlane.xlu0 %317
        %v319 = vadd.f32 %v313, %v318
        %320 = vst.msk [vmem:[#allocation3] sm:$0xff] %vm311, %v319
        // Predicated region
        $region37: #{tpu_custom_call.1} parent=27 // pred_check
          %p321 = pneg %p299
        $region38: #{tpu_custom_call.1} parent=27 // pred_check_branch
          %323 = sbr.rel (%p321) target = $region40
        $region39: #{tpu_custom_call.1} parent=27 // pred_region
          %v324 = vld [vmem:[#allocation2] sm:$0xff]
          %325 = vst.msk [vmem:[%s210] sm:$0xff] %vm311, %v324
          %v326 = vld [vmem:[#allocation3] sm:$0xff]
          %327 = vst.msk [vmem:[%s214] sm:$0xff] %vm311, %v326
        $region40: #{tpu_custom_call.1} parent=27 // pred_fallthru
          _
        %p328 = scmp.lt.s32.totalorder %s22, 1
        %s329 = scalar_select %p328, %s22, 1
        %s330 = smul.addr %s329, 8
        %s331 = scalar_lea.vmem %s2, %s330
        %p332 = scmp.lt.s32.totalorder %s22, 1
        %s333 = scalar_select %p332, %s22, 1
        %s334 = smul.addr %s333, 8
        %s335 = scalar_lea.vmem %s3, %s334
        // Predicated region
        $region41: #{tpu_custom_call.1} parent=27 // pred_check
          %p336 = pneg %p97
        $region42: #{tpu_custom_call.1} parent=27 // pred_check_branch
          %338 = sbr.rel (%p336) target = $region44
        $region43: #{tpu_custom_call.1} parent=27 // pred_region
          _
        $region44: #{tpu_custom_call.1} parent=27 // pred_fallthru
          _
        // Predicated region
        $region45: #{tpu_custom_call.1} parent=27 // pred_check
          %p339 = pneg %p123
        $region46: #{tpu_custom_call.1} parent=27 // pred_check_branch
          %341 = sbr.rel (%p339) target = $region48
        $region47: #{tpu_custom_call.1} parent=27 // pred_region
          _
        $region48: #{tpu_custom_call.1} parent=27 // pred_fallthru
          _
      $region28: #{tpu_custom_call.1} parent=5 // pred_fallthru
        _
      %p342 = scmp.le.s32.totalorder 2, %s13
      // Predicated region
      $region49: #{tpu_custom_call.1} parent=5 // pred_check
        %p343 = pneg %p342
      $region50: #{tpu_custom_call.1} parent=5 // pred_check_branch
        %345 = sbr.rel (%p343) target = $region52
      $region51: #{tpu_custom_call.1} parent=5 // pred_region
        %s346 = ssub.s32 %s13, 2
        // Predicated region
        $region53: #{tpu_custom_call.1} parent=51 // pred_check
          %p347 = pneg %p103
        $region54: #{tpu_custom_call.1} parent=51 // pred_check_branch
          %349 = sbr.rel (%p347) target = $region56
        $region55: #{tpu_custom_call.1} parent=51 // pred_region
          %p350 = scmp.lt.s32.totalorder %s24, 1
          %s351 = scalar_select %p350, %s24, 1
          %s352 = smul.addr %s351, 8
          %s353 = scalar_lea.vmem %s2, %s352
        $region56: #{tpu_custom_call.1} parent=51 // pred_fallthru
          _
        // Predicated region
        $region57: #{tpu_custom_call.1} parent=51 // pred_check
          %p354 = pneg %p129
        $region58: #{tpu_custom_call.1} parent=51 // pred_check_branch
          %356 = sbr.rel (%p354) target = $region60
        $region59: #{tpu_custom_call.1} parent=51 // pred_region
          %p357 = scmp.lt.s32.totalorder %s24, 1
          %s358 = scalar_select %p357, %s24, 1
          %s359 = smul.addr %s358, 8
          %s360 = scalar_lea.vmem %s3, %s359
        $region60: #{tpu_custom_call.1} parent=51 // pred_fallthru
          _
      $region52: #{tpu_custom_call.1} parent=5 // pred_fallthru
        _
    $region6: #{tpu_custom_call.1} parent=1 // loop_footer
      %s17 = sadd.s32 1, %s13
    $region7: #{tpu_custom_call.1} parent=1 // loop_footer_branch
      %12 = sbr.rel target = $region3
    $region8: #{tpu_custom_call.1} parent=1 // loop_exit
      _
    %361 = vsyncpa [#allocation5], 1
    %s362 = scalar_lea.sflag [#allocation5], 1
    %363 = vsyncpa %s362, 1

</llo_original>
